<compile_context>
chip_gen: v5e
topology: v5e:2x2
jax: 0.10.0
libtpu: 0.0.40
codegen_flags: <defaults>
</compile_context>

<pallas_src>
import jax
import jax.numpy as jnp
import numpy as np
from jax.experimental import pallas as pl
from jax.experimental.pallas import tpu as pltpu

LANE = 128  # lane width; small weight matrices are zero-padded to 128x128 (a few KiB each)


def pad_to(a, shape):
    """Zero-pad `a` up to `shape`.  Correctness of the padded-lane scheme relies on zero fill:
    zero weight rows/cols + zero bias + ReLU(0)=0 keep all padded feature lanes at exactly 0."""
    return jnp.pad(a, [(0, t - s) for s, t in zip(a.shape, shape)])


def im2col(x, kh=3, kw=3):
    """x: [B, C, H, W] (NCHW), 3x3 conv, stride 1, padding 1 -> [B, H*W, C*kh*kw] (UNPADDED)."""
    B, C, H, W = x.shape
    xp = jnp.pad(x, ((0, 0), (0, 0), (1, 1), (1, 1)))
    cols = []
    for dy in range(kh):
        for dx in range(kw):
            cols.append(xp[:, :, dy:dy + H, dx:dx + W])      # [B, C, H, W]
    patches = jnp.stack(cols, axis=2)                         # [B, C, kh*kw, H, W]
    patches = patches.transpose(0, 3, 4, 1, 2)                # [B, H, W, C, kh*kw]
    # last index order = c*9 + dy*3 + dx, matching conv_w.reshape(C_out, C_in*9)
    return patches.reshape(B, H * W, C * kh * kw)
# TODO(synk): the im2col gather/transpose remains plain-JAX glue; a further optimization is to
# express the 3x3 conv as 9 shifted in-VMEM matmuls on the raw NHWC tile (HBM traffic ~1x of x).


# ------------------------------ fused Pallas kernel ---------------------------

def ciddg_fused_kernel(patches_ref, wE_ref, bE_ref, wM_ref, bM_ref,
                       w1_ref, b1_ref, w2_ref, b2_ref,
                       cls_ref, dom_ref, feat_sc):
    # patches_ref: (1, HW, K9)   weights: (128, 128)   biases: (1, 128)
    # cls_ref/dom_ref: (B, 128)  feat_sc: VMEM (B, 128) scratch, persists across grid steps
    b = pl.program_id(0)
    hw, k9 = patches_ref.shape[1], patches_ref.shape[2]

    # --- E: conv3x3 (im2col matmul) + bias + ReLU + global average pool -------------------
    # K-padding to 128 lanes happens here in VMEM (free); patches stay at 36 lanes in HBM.
    p = jnp.concatenate(
        [patches_ref[0], jnp.zeros((hw, LANE - k9), jnp.float32)], axis=-1)   # [HW, 128]
    conv = jnp.dot(p, wE_ref[...], preferred_element_type=jnp.float32)
    conv = jnp.maximum(conv + bE_ref[...], 0.0)                               # [HW, 128]
    feat_sc[pl.ds(b, 1), :] = jnp.mean(conv, axis=0, keepdims=True)           # pooled feature

    # --- M + D epilogue on the last grid step: feat never round-trips through HBM ---------
    @pl.when(b == pl.num_programs(0) - 1)
    def _():
        feat = feat_sc[...]                                                   # [B, 128]
        cls_ref[...] = (jnp.dot(feat, wM_ref[...],
                                preferred_element_type=jnp.float32) + bM_ref[...])
        # ReverseLayerF / GradMultiplyLayerF are identity in the forward pass, and every
        # Ds[k] is a deepcopy of the same D -> compute the discriminator exactly once.
        h = jnp.maximum(jnp.dot(feat, w1_ref[...],
                                preferred_element_type=jnp.float32) + b1_ref[...], 0.0)
        dom_ref[...] = (jnp.dot(h, w2_ref[...],
                                preferred_element_type=jnp.float32) + b2_ref[...])


# ------------------------------ CIDDG forward ---------------------------------

def ciddg_forward(x, conv_w, conv_b, m_w, m_b, d_w1, d_b1, d_w2, d_b2, num_classes):
    B, C_in, H, W = x.shape
    C_feat = conv_w.shape[0]
    num_cls_out = m_w.shape[0]
    num_domains = d_w2.shape[0]
    HW = H * W
    K9 = C_in * 9

    patches = im2col(x)                                            # [B, HW, 36] — no HBM lane padding
    # Weight matrices are tiny; pad them to 128x128 so every dot is a clean 128-aligned MXU op.
    wE = pad_to(conv_w.reshape(C_feat, K9).T, (LANE, LANE))        # [36,8] -> [128,128]
    bE = pad_to(conv_b.reshape(1, C_feat), (1, LANE))
    wM = pad_to(m_w.T, (LANE, LANE))
    bM = pad_to(m_b.reshape(1, -1), (1, LANE))
    w1 = pad_to(d_w1.T, (LANE, LANE))                              # single copy; NOT broadcast to NC
    b1 = pad_to(d_b1.reshape(1, -1), (1, LANE))
    w2 = pad_to(d_w2.T, (LANE, LANE))
    b2 = pad_to(d_b2.reshape(1, -1), (1, LANE))

    const = lambda b: (0, 0)   # constant block index -> operand stays VMEM-resident across steps
    cls_p, dom_p = pl.pallas_call(
        ciddg_fused_kernel,
        out_shape=(jax.ShapeDtypeStruct((B, LANE), jnp.float32),
                   jax.ShapeDtypeStruct((B, LANE), jnp.float32)),
        grid=(B,),
        in_specs=[pl.BlockSpec((1, HW, K9), lambda b: (b, 0, 0)),  # patches, per-image
                  pl.BlockSpec((LANE, LANE), const),               # wE
                  pl.BlockSpec((1, LANE), const),                  # bE
                  pl.BlockSpec((LANE, LANE), const),               # wM
                  pl.BlockSpec((1, LANE), const),                  # bM
                  pl.BlockSpec((LANE, LANE), const),               # wD1
                  pl.BlockSpec((1, LANE), const),                  # bD1
                  pl.BlockSpec((LANE, LANE), const),               # wD2
                  pl.BlockSpec((1, LANE), const)],                 # bD2
        out_specs=(pl.BlockSpec((B, LANE), const),                 # class logits (lane-dense)
                   pl.BlockSpec((B, LANE), const)),                # domain logits (lane-dense)
        scratch_shapes=[pltpu.VMEM((B, LANE), jnp.float32)],       # pooled features, VMEM only
        compiler_params=pltpu.CompilerParams(
            # The epilogue on the last step consumes every step's pooled feature through the
            # shared VMEM scratch, so the batch axis must stay sequential ("arbitrary").
            dimension_semantics=("arbitrary",)),
    )(patches, wE, bE, wM, bM, w1, b1, w2, b2)

    class_out = cls_p[:, :num_cls_out]
    dom = dom_p[:, :num_domains]
    # All Ds[k] share identical (deepcopy'd) weights -> identical forward outputs; return the
    # single computed result num_classes times (no extra compute, no extra copies).
    domain_outputs = [dom] * num_classes
    return class_out, domain_outputs


# -------------------------------- reference -----------------------------------

def reference(x, conv_w, conv_b, m_w, m_b, d_w1, d_b1, d_w2, d_b2):
    C_feat = conv_w.shape[0]
    patches = im2col(x)                                            # [B, HW, C_in*9]
    conv = jnp.maximum(patches @ conv_w.reshape(C_feat, -1).T + conv_b, 0.0)
    feat = conv.mean(axis=1)                                       # [B, C_feat]
    class_out = feat @ m_w.T + m_b
    h = jnp.maximum(feat @ d_w1.T + d_b1, 0.0)
    dom = h @ d_w2.T + d_b2                                        # identical for every D_k
    return class_out, dom


if __name__ == "__main__":
    B, C_in, H, W = 2, 4, 16, 16
    C_feat, hidden = 8, 32
    num_classes, num_domains = 5, 3
    alpha = 1.0  # alpha / ReverseLayerF only alter gradients, not the forward pass.

    key = jax.random.PRNGKey(0)
    k = jax.random.split(key, 9)
    conv_w = jax.random.normal(k[0], (C_feat, C_in, 3, 3), jnp.float32) * 0.1
    conv_b = jax.random.normal(k[1], (C_feat,), jnp.float32) * 0.1
    m_w = jax.random.normal(k[2], (num_classes, C_feat), jnp.float32) * 0.1
    m_b = jax.random.normal(k[3], (num_classes,), jnp.float32) * 0.1
    # one D, deepcopy'd num_classes times -> every Ds[k] starts with identical weights
    d_w1 = jax.random.normal(k[4], (hidden, C_feat), jnp.float32) * 0.1
    d_b1 = jax.random.normal(k[5], (hidden,), jnp.float32) * 0.1
    d_w2 = jax.random.normal(k[6], (num_domains, hidden), jnp.float32) * 0.1
    d_b2 = jax.random.normal(k[7], (num_domains,), jnp.float32) * 0.1

    x = jax.random.normal(k[8], (B, C_in, H, W), jnp.float32)

    class_out, domain_outputs = ciddg_forward(
        x, conv_w, conv_b, m_w, m_b, d_w1, d_b1, d_w2, d_b2, num_classes)
    class_out = jax.block_until_ready(class_out)
    domain_outputs = [jax.block_until_ready(d) for d in domain_outputs]

    ref_class, ref_dom = reference(x, conv_w, conv_b, m_w, m_b, d_w1, d_b1, d_w2, d_b2)
    np.testing.assert_allclose(np.asarray(class_out), np.asarray(ref_class),
                               rtol=1e-5, atol=1e-5)
    for d in domain_outputs:
        np.testing.assert_allclose(np.asarray(d), np.asarray(ref_dom),
                                   rtol=1e-5, atol=1e-5)

    assert class_out.shape == (B, num_classes)
    assert len(domain_outputs) == num_classes
    assert all(d.shape == (B, num_domains) for d in domain_outputs)
    print("KERNEL_OK")
</pallas_src>

<mosaic_0001>
module attributes {stable_mosaic.version = 11 : i64} {
  func.func @ciddg_fused_kernel(%arg0: i32, %arg1: memref<1x256x36xf32, #tpu.memory_space<vmem>>, %arg2: memref<128x128xf32, #tpu.memory_space<vmem>>, %arg3: memref<1x128xf32, #tpu.memory_space<vmem>>, %arg4: memref<128x128xf32, #tpu.memory_space<vmem>>, %arg5: memref<1x128xf32, #tpu.memory_space<vmem>>, %arg6: memref<128x128xf32, #tpu.memory_space<vmem>>, %arg7: memref<1x128xf32, #tpu.memory_space<vmem>>, %arg8: memref<128x128xf32, #tpu.memory_space<vmem>>, %arg9: memref<1x128xf32, #tpu.memory_space<vmem>>, %arg10: memref<2x128xf32, #tpu.memory_space<vmem>>, %arg11: memref<2x128xf32, #tpu.memory_space<vmem>>, %arg12: memref<2x128xf32, #tpu.memory_space<vmem>>) attributes {dimension_semantics = [#tpu.dimension_semantics<arbitrary>], iteration_bounds = array<i64: 2>, scalar_prefetch = 0 : i64, scratch_operands = 1 : i64, tpu.core_type = #tpu.core_type<tc>, window_params = [{transform_indices = @transform_0, window_bounds = array<i64: 1, 256, 36>}, {pipeline_mode = #tpu.pipeline_mode<synchronous>, transform_indices = @transform_1, window_bounds = array<i64: 128, 128>}, {pipeline_mode = #tpu.pipeline_mode<synchronous>, transform_indices = @transform_2, window_bounds = array<i64: 1, 128>}, {pipeline_mode = #tpu.pipeline_mode<synchronous>, transform_indices = @transform_3, window_bounds = array<i64: 128, 128>}, {pipeline_mode = #tpu.pipeline_mode<synchronous>, transform_indices = @transform_4, window_bounds = array<i64: 1, 128>}, {pipeline_mode = #tpu.pipeline_mode<synchronous>, transform_indices = @transform_5, window_bounds = array<i64: 128, 128>}, {pipeline_mode = #tpu.pipeline_mode<synchronous>, transform_indices = @transform_6, window_bounds = array<i64: 1, 128>}, {pipeline_mode = #tpu.pipeline_mode<synchronous>, transform_indices = @transform_7, window_bounds = array<i64: 128, 128>}, {pipeline_mode = #tpu.pipeline_mode<synchronous>, transform_indices = @transform_8, window_bounds = array<i64: 1, 128>}, {pipeline_mode = #tpu.pipeline_mode<synchronous>, transform_indices = @transform_9, window_bounds = array<i64: 2, 128>}, {pipeline_mode = #tpu.pipeline_mode<synchronous>, transform_indices = @transform_10, window_bounds = array<i64: 2, 128>}]} {
    %c0 = arith.constant 0 : index
    %c0_0 = arith.constant 0 : index
    %c0_1 = arith.constant 0 : index
    %0 = vector.load %arg1[%c0, %c0_0, %c0_1] : memref<1x256x36xf32, #tpu.memory_space<vmem>>, vector<1x256x36xf32>
    %1 = vector.shape_cast %0 : vector<1x256x36xf32> to vector<256x36xf32>
    %cst = arith.constant 0.000000e+00 : f32
    %2 = vector.broadcast %cst : f32 to vector<256x92xf32>
    %3 = tpu.concatenate %1, %2 in 1 : vector<256x36xf32>, vector<256x92xf32> -> vector<256x128xf32>
    %c0_2 = arith.constant 0 : index
    %c0_3 = arith.constant 0 : index
    %4 = vector.load %arg2[%c0_2, %c0_3] : memref<128x128xf32, #tpu.memory_space<vmem>>, vector<128x128xf32>
    %cst_4 = arith.constant dense<0.000000e+00> : vector<256x128xf32>
    %5 = tpu.matmul %3, %4, %cst_4 {dimension_numbers = #tpu.dot_dimension_numbers<[1], [0], [0], [1], [0, 0, 1, 1], [], []>} : vector<256x128xf32>, vector<128x128xf32>, vector<256x128xf32> -> vector<256x128xf32>
    %c0_5 = arith.constant 0 : index
    %c0_6 = arith.constant 0 : index
    %6 = vector.load %arg3[%c0_5, %c0_6] : memref<1x128xf32, #tpu.memory_space<vmem>>, vector<1x128xf32>
    %7 = vector.broadcast %6 : vector<1x128xf32> to vector<256x128xf32>
    %8 = arith.addf %5, %7 : vector<256x128xf32>
    %cst_7 = arith.constant 0.000000e+00 : f32
    %9 = vector.broadcast %cst_7 : f32 to vector<256x128xf32>
    %10 = arith.maximumf %8, %9 : vector<256x128xf32>
    %cst_8 = arith.constant dense<0.000000e+00> : vector<128xf32>
    %11 = vector.multi_reduction <add>, %10, %cst_8 [0] : vector<256x128xf32> to vector<128xf32>
    %12 = vector.shape_cast %11 : vector<128xf32> to vector<1x128xf32>
    %cst_9 = arith.constant 2.560000e+02 : f32
    %13 = vector.broadcast %cst_9 : f32 to vector<1x128xf32>
    %14 = arith.divf %12, %13 : vector<1x128xf32>
    %15 = arith.index_cast %arg0 : i32 to index
    %c0_10 = arith.constant 0 : index
    %16 = vector.load %arg12[%15, %c0_10] : memref<2x128xf32, #tpu.memory_space<vmem>>, vector<1x128xf32>
    tpu.vector_store %arg12[%15, %c0_10], %14 {strides = array<i32>} : memref<2x128xf32, #tpu.memory_space<vmem>>, vector<1x128xf32>,
    %c1_i32 = arith.constant 1 : i32
    %17 = arith.cmpi eq, %arg0, %c1_i32 : i32
    %18 = arith.extui %17 : i1 to i32
    %c0_i32 = arith.constant 0 : i32
    %19 = arith.cmpi ne, %18, %c0_i32 : i32
    scf.if %19 {
      %c0_11 = arith.constant 0 : index
      %c0_12 = arith.constant 0 : index
      %20 = vector.load %arg12[%c0_11, %c0_12] : memref<2x128xf32, #tpu.memory_space<vmem>>, vector<2x128xf32>
      %c0_13 = arith.constant 0 : index
      %c0_14 = arith.constant 0 : index
      %21 = vector.load %arg4[%c0_13, %c0_14] : memref<128x128xf32, #tpu.memory_space<vmem>>, vector<128x128xf32>
      %cst_15 = arith.constant dense<0.000000e+00> : vector<2x128xf32>
      %22 = tpu.matmul %20, %21, %cst_15 {dimension_numbers = #tpu.dot_dimension_numbers<[1], [0], [0], [1], [0, 0, 1, 1], [], []>} : vector<2x128xf32>, vector<128x128xf32>, vector<2x128xf32> -> vector<2x128xf32>
      %c0_16 = arith.constant 0 : index
      %c0_17 = arith.constant 0 : index
      %23 = vector.load %arg5[%c0_16, %c0_17] : memref<1x128xf32, #tpu.memory_space<vmem>>, vector<1x128xf32>
      %24 = vector.broadcast %23 : vector<1x128xf32> to vector<2x128xf32>
      %25 = arith.addf %22, %24 : vector<2x128xf32>
      %c0_18 = arith.constant 0 : index
      %c0_19 = arith.constant 0 : index
      %26 = vector.load %arg10[%c0_18, %c0_19] : memref<2x128xf32, #tpu.memory_space<vmem>>, vector<2x128xf32>
      tpu.vector_store %arg10[%c0_18, %c0_19], %25 {strides = array<i32>} : memref<2x128xf32, #tpu.memory_space<vmem>>, vector<2x128xf32>,
      %c0_20 = arith.constant 0 : index
      %c0_21 = arith.constant 0 : index
      %27 = vector.load %arg6[%c0_20, %c0_21] : memref<128x128xf32, #tpu.memory_space<vmem>>, vector<128x128xf32>
      %cst_22 = arith.constant dense<0.000000e+00> : vector<2x128xf32>
      %28 = tpu.matmul %20, %27, %cst_22 {dimension_numbers = #tpu.dot_dimension_numbers<[1], [0], [0], [1], [0, 0, 1, 1], [], []>} : vector<2x128xf32>, vector<128x128xf32>, vector<2x128xf32> -> vector<2x128xf32>
      %c0_23 = arith.constant 0 : index
      %c0_24 = arith.constant 0 : index
      %29 = vector.load %arg7[%c0_23, %c0_24] : memref<1x128xf32, #tpu.memory_space<vmem>>, vector<1x128xf32>
      %30 = vector.broadcast %29 : vector<1x128xf32> to vector<2x128xf32>
      %31 = arith.addf %28, %30 : vector<2x128xf32>
      %cst_25 = arith.constant 0.000000e+00 : f32
      %32 = vector.broadcast %cst_25 : f32 to vector<2x128xf32>
      %33 = arith.maximumf %31, %32 : vector<2x128xf32>
      %c0_26 = arith.constant 0 : index
      %c0_27 = arith.constant 0 : index
      %34 = vector.load %arg8[%c0_26, %c0_27] : memref<128x128xf32, #tpu.memory_space<vmem>>, vector<128x128xf32>
      %cst_28 = arith.constant dense<0.000000e+00> : vector<2x128xf32>
      %35 = tpu.matmul %33, %34, %cst_28 {dimension_numbers = #tpu.dot_dimension_numbers<[1], [0], [0], [1], [0, 0, 1, 1], [], []>} : vector<2x128xf32>, vector<128x128xf32>, vector<2x128xf32> -> vector<2x128xf32>
      %c0_29 = arith.constant 0 : index
      %c0_30 = arith.constant 0 : index
      %36 = vector.load %arg9[%c0_29, %c0_30] : memref<1x128xf32, #tpu.memory_space<vmem>>, vector<1x128xf32>
      %37 = vector.broadcast %36 : vector<1x128xf32> to vector<2x128xf32>
      %38 = arith.addf %35, %37 : vector<2x128xf32>
      %c0_31 = arith.constant 0 : index
      %c0_32 = arith.constant 0 : index
      %39 = vector.load %arg11[%c0_31, %c0_32] : memref<2x128xf32, #tpu.memory_space<vmem>>, vector<2x128xf32>
      tpu.vector_store %arg11[%c0_31, %c0_32], %38 {strides = array<i32>} : memref<2x128xf32, #tpu.memory_space<vmem>>, vector<2x128xf32>,
    } else {
    }
    return
  }
  func.func @transform_0(%arg0: i32) -> (i32, i32, i32) {
    %c0_i32 = arith.constant 0 : i32
    %c0_i32_0 = arith.constant 0 : i32
    %c0_i32_1 = arith.constant 0 : i32
    return %arg0, %c0_i32, %c0_i32_0 : i32, i32, i32
  }
  func.func @transform_1(%arg0: i32) -> (i32, i32) {
    %c0_i32 = arith.constant 0 : i32
    %c0_i32_0 = arith.constant 0 : i32
    %c0_i32_1 = arith.constant 0 : i32
    return %c0_i32, %c0_i32_0 : i32, i32
  }
  func.func @transform_2(%arg0: i32) -> (i32, i32) {
    %c0_i32 = arith.constant 0 : i32
    %c0_i32_0 = arith.constant 0 : i32
    %c0_i32_1 = arith.constant 0 : i32
    return %c0_i32, %c0_i32_0 : i32, i32
  }
  func.func @transform_3(%arg0: i32) -> (i32, i32) {
    %c0_i32 = arith.constant 0 : i32
    %c0_i32_0 = arith.constant 0 : i32
    %c0_i32_1 = arith.constant 0 : i32
    return %c0_i32, %c0_i32_0 : i32, i32
  }
  func.func @transform_4(%arg0: i32) -> (i32, i32) {
    %c0_i32 = arith.constant 0 : i32
    %c0_i32_0 = arith.constant 0 : i32
    %c0_i32_1 = arith.constant 0 : i32
    return %c0_i32, %c0_i32_0 : i32, i32
  }
  func.func @transform_5(%arg0: i32) -> (i32, i32) {
    %c0_i32 = arith.constant 0 : i32
    %c0_i32_0 = arith.constant 0 : i32
    %c0_i32_1 = arith.constant 0 : i32
    return %c0_i32, %c0_i32_0 : i32, i32
  }
  func.func @transform_6(%arg0: i32) -> (i32, i32) {
    %c0_i32 = arith.constant 0 : i32
    %c0_i32_0 = arith.constant 0 : i32
    %c0_i32_1 = arith.constant 0 : i32
    return %c0_i32, %c0_i32_0 : i32, i32
  }
  func.func @transform_7(%arg0: i32) -> (i32, i32) {
    %c0_i32 = arith.constant 0 : i32
    %c0_i32_0 = arith.constant 0 : i32
    %c0_i32_1 = arith.constant 0 : i32
    return %c0_i32, %c0_i32_0 : i32, i32
  }
  func.func @transform_8(%arg0: i32) -> (i32, i32) {
    %c0_i32 = arith.constant 0 : i32
    %c0_i32_0 = arith.constant 0 : i32
    %c0_i32_1 = arith.constant 0 : i32
    return %c0_i32, %c0_i32_0 : i32, i32
  }
  func.func @transform_9(%arg0: i32) -> (i32, i32) {
    %c0_i32 = arith.constant 0 : i32
    %c0_i32_0 = arith.constant 0 : i32
    %c0_i32_1 = arith.constant 0 : i32
    return %c0_i32, %c0_i32_0 : i32, i32
  }
  func.func @transform_10(%arg0: i32) -> (i32, i32) {
    %c0_i32 = arith.constant 0 : i32
    %c0_i32_0 = arith.constant 0 : i32
    %c0_i32_1 = arith.constant 0 : i32
    return %c0_i32, %c0_i32_0 : i32, i32
  }
}

</mosaic_0001>

<llo_original>
// kernel: tpu_custom_call.1
$region0: #{tpu_custom_call.1}
  #allocation0 [shape = 'u32[]', space=smem, size = 0x4, offset = 0x4, fixed_abs, tag = 'smem constant byte address 0x4 - core index']
  #allocation1 [shape = 'u32[72,128]{1,0:T(1,128)}', space=vmem, size = 0x9000, scoped, tag = 'internal scratch']
  #allocation2 [shape = 'f32[2,128]{1,0:T(2,128)}', space=vmem, size = 0x400, scoped, tag = 'scratch operand']
  %s0 = inlined_call_operand.vmem [shape: f32[2,256,36], index: 0, kind: input, shape index: {}]
  %s1 = inlined_call_operand.vmem [shape: f32[128,128], index: 1, kind: input, shape index: {}]
  %s2 = inlined_call_operand.vmem [shape: f32[1,128], index: 2, kind: input, shape index: {}]
  %s3 = inlined_call_operand.vmem [shape: f32[128,128], index: 3, kind: input, shape index: {}]
  %s4 = inlined_call_operand.vmem [shape: f32[1,128], index: 4, kind: input, shape index: {}]
  %s5 = inlined_call_operand.vmem [shape: f32[128,128], index: 5, kind: input, shape index: {}]
  %s6 = inlined_call_operand.vmem [shape: f32[1,128], index: 6, kind: input, shape index: {}]
  %s7 = inlined_call_operand.vmem [shape: f32[128,128], index: 7, kind: input, shape index: {}]
  %s8 = inlined_call_operand.vmem [shape: f32[1,128], index: 8, kind: input, shape index: {}]
  %s9 = inlined_call_operand.hbm [shape: f32[2,128], index: 9, kind: output, shape index: {0}]
  %s10 = inlined_call_operand.hbm [shape: f32[2,128], index: 10, kind: output, shape index: {1}]
  %11 = xla_tuple %s9, %s10
  %s12 = sld [smem:[#allocation0]]
  $region81: #{tpu_custom_call.1} parent=0
    _
  %s14 = ssub.s32 1, %s12
  %s15 = scalar_select 0, %s14, %s12
  $region1: #{tpu_custom_call.1} parent=0
    #allocation3 [shape = 'u8[1024]{0}', space=vmem, size = 0x400, scoped, tag = 'output window, operand 0, single buffered']
    #allocation4 [shape = 's32[2]{0}', space=sflag, size = 0x8, scoped, tag = 'scoped memory for tpu_custom_call.1']
    #allocation5 [shape = 'u8[1024]{0}', space=vmem, size = 0x400, scoped, tag = 'output window, operand 1, single buffered']
    #allocation6 [shape = 's32[1]{0}', space=sflag, size = 0x4, scoped, tag = 'scoped memory for tpu_custom_call.1']
    %16 = vsyncpa [#allocation4], 0
    %17 = vsyncpa [#allocation6], 0
    loop: start=0, step=1, limit=4
    $region2: #{tpu_custom_call.1} parent=1 // loop_pre_header
      _
    $region3: #{tpu_custom_call.1} parent=1 // loop_header
      %s19 = sphi 0, %s23
      %p20 = scmp.ge.s32.totalorder %s19, 4
      %s29 = sphi 0, %s31
      %s32 = sphi 0, %s29
      %s33 = sphi 0, %s32
      %s49 = sphi 0, %s33
      %s53 = sphi 0, %s53
      %s55 = sphi 0, %s53
      %s56 = sphi 0, %s55
      %s70 = sphi 0, %s56
      %s74 = sphi 0, %s74
      %s76 = sphi 0, %s74
      %s77 = sphi 0, %s76
      %s91 = sphi 0, %s77
      %s95 = sphi 0, %s95
      %s97 = sphi 0, %s95
      %s98 = sphi 0, %s97
      %s112 = sphi 0, %s98
      %s116 = sphi 0, %s116
      %s118 = sphi 0, %s116
      %s119 = sphi 0, %s118
      %s133 = sphi 0, %s119
      %s137 = sphi 0, %s137
      %s139 = sphi 0, %s137
      %s140 = sphi 0, %s139
      %s154 = sphi 0, %s140
      %s158 = sphi 0, %s158
      %s160 = sphi 0, %s158
      %s161 = sphi 0, %s160
      %s175 = sphi 0, %s161
      %s179 = sphi 0, %s179
      %s181 = sphi 0, %s179
      %s182 = sphi 0, %s181
      %s196 = sphi 0, %s182
      %s200 = sphi 0, %s200
      %s202 = sphi 0, %s200
      %s203 = sphi 0, %s202
      %s217 = sphi 0, %s203
      %s221 = sphi 0, %s221
      %s223 = sphi 0, %s221
      %s224 = sphi 0, %s223
      %s238 = sphi 0, %s224
      %s242 = sphi 0, %s242
      %s244 = sphi 0, %s242
      %s245 = sphi 0, %s244
      %s259 = sphi 0, %s245
    $region4: #{tpu_custom_call.1} parent=1 // loop_header_branch
      %22 = sbr.rel (%p20) target = $region8
    $region5: #{tpu_custom_call.1} parent=1 // loop_body
      %s24 = ssub.s32 %s19, 1
      %s25 = ssub.s32 %s19, 2
      %s26 = sadd.s32 %s19, 1
      %s27 = ssub.s32 %s19, %s26
      %p28 = scmp.eq.s32.totalorder %s27, 0
      %s30 = sadd.s32 %s29, 1
      %s31 = scalar_select %p28, %s29, %s30
      %p34 = pneg %p28
      %p35 = scmp.eq.s32.totalorder %s19, 1
      %p36 = por %p34, %p35
      %p37 = scmp.ne.s32.totalorder %s29, %s32
      %p38 = scmp.eq.s32.totalorder %s19, 0
      %p39 = por %p37, %p38
      %p40 = scmp.ne.s32.totalorder %s29, %s32
      %p41 = scmp.eq.s32.totalorder %s24, 1
      %p42 = por %p40, %p41
      %p43 = scmp.ne.s32.totalorder %s32, %s33
      %p44 = scmp.eq.s32.totalorder %s24, 0
      %p45 = por %p43, %p44
      %p46 = scmp.ne.s32.totalorder %s32, %s33
      %p47 = scmp.eq.s32.totalorder %s25, 1
      %p48 = por %p46, %p47
      %p50 = scmp.ne.s32.totalorder %s33, %s49
      %p51 = scmp.eq.s32.totalorder %s25, 0
      %p52 = por %p50, %p51
      %s54 = sadd.s32 %s53, 1
      %p57 = scmp.eq.s32.totalorder %s19, 1
      %p58 = scmp.ne.s32.totalorder %s53, %s55
      %p59 = scmp.eq.s32.totalorder %s19, 0
      %p60 = por %p58, %p59
      %p61 = scmp.ne.s32.totalorder %s53, %s55
      %p62 = scmp.eq.s32.totalorder %s24, 1
      %p63 = por %p61, %p62
      %p64 = scmp.ne.s32.totalorder %s55, %s56
      %p65 = scmp.eq.s32.totalorder %s24, 0
      %p66 = por %p64, %p65
      %p67 = scmp.ne.s32.totalorder %s55, %s56
      %p68 = scmp.eq.s32.totalorder %s25, 1
      %p69 = por %p67, %p68
      %p71 = scmp.ne.s32.totalorder %s56, %s70
      %p72 = scmp.eq.s32.totalorder %s25, 0
      %p73 = por %p71, %p72
      %s75 = sadd.s32 %s74, 1
      %p78 = scmp.eq.s32.totalorder %s19, 1
      %p79 = scmp.ne.s32.totalorder %s74, %s76
      %p80 = scmp.eq.s32.totalorder %s19, 0
      %p81 = por %p79, %p80
      %p82 = scmp.ne.s32.totalorder %s74, %s76
      %p83 = scmp.eq.s32.totalorder %s24, 1
      %p84 = por %p82, %p83
      %p85 = scmp.ne.s32.totalorder %s76, %s77
      %p86 = scmp.eq.s32.totalorder %s24, 0
      %p87 = por %p85, %p86
      %p88 = scmp.ne.s32.totalorder %s76, %s77
      %p89 = scmp.eq.s32.totalorder %s25, 1
      %p90 = por %p88, %p89
      %p92 = scmp.ne.s32.totalorder %s77, %s91
      %p93 = scmp.eq.s32.totalorder %s25, 0
      %p94 = por %p92, %p93
      %s96 = sadd.s32 %s95, 1
      %p99 = scmp.eq.s32.totalorder %s19, 1
      %p100 = scmp.ne.s32.totalorder %s95, %s97
      %p101 = scmp.eq.s32.totalorder %s19, 0
      %p102 = por %p100, %p101
      %p103 = scmp.ne.s32.totalorder %s95, %s97
      %p104 = scmp.eq.s32.totalorder %s24, 1
      %p105 = por %p103, %p104
      %p106 = scmp.ne.s32.totalorder %s97, %s98
      %p107 = scmp.eq.s32.totalorder %s24, 0
      %p108 = por %p106, %p107
      %p109 = scmp.ne.s32.totalorder %s97, %s98
      %p110 = scmp.eq.s32.totalorder %s25, 1
      %p111 = por %p109, %p110
      %p113 = scmp.ne.s32.totalorder %s98, %s112
      %p114 = scmp.eq.s32.totalorder %s25, 0
      %p115 = por %p113, %p114
      %s117 = sadd.s32 %s116, 1
      %p120 = scmp.eq.s32.totalorder %s19, 1
      %p121 = scmp.ne.s32.totalorder %s116, %s118
      %p122 = scmp.eq.s32.totalorder %s19, 0
      %p123 = por %p121, %p122
      %p124 = scmp.ne.s32.totalorder %s116, %s118
      %p125 = scmp.eq.s32.totalorder %s24, 1
      %p126 = por %p124, %p125
      %p127 = scmp.ne.s32.totalorder %s118, %s119
      %p128 = scmp.eq.s32.totalorder %s24, 0
      %p129 = por %p127, %p128
      %p130 = scmp.ne.s32.totalorder %s118, %s119
      %p131 = scmp.eq.s32.totalorder %s25, 1
      %p132 = por %p130, %p131
      %p134 = scmp.ne.s32.totalorder %s119, %s133
      %p135 = scmp.eq.s32.totalorder %s25, 0
      %p136 = por %p134, %p135
      %s138 = sadd.s32 %s137, 1
      %p141 = scmp.eq.s32.totalorder %s19, 1
      %p142 = scmp.ne.s32.totalorder %s137, %s139
      %p143 = scmp.eq.s32.totalorder %s19, 0
      %p144 = por %p142, %p143
      %p145 = scmp.ne.s32.totalorder %s137, %s139
      %p146 = scmp.eq.s32.totalorder %s24, 1
      %p147 = por %p145, %p146
      %p148 = scmp.ne.s32.totalorder %s139, %s140
      %p149 = scmp.eq.s32.totalorder %s24, 0
      %p150 = por %p148, %p149
      %p151 = scmp.ne.s32.totalorder %s139, %s140
      %p152 = scmp.eq.s32.totalorder %s25, 1
      %p153 = por %p151, %p152
      %p155 = scmp.ne.s32.totalorder %s140, %s154
      %p156 = scmp.eq.s32.totalorder %s25, 0
      %p157 = por %p155, %p156
      %s159 = sadd.s32 %s158, 1
      %p162 = scmp.eq.s32.totalorder %s19, 1
      %p163 = scmp.ne.s32.totalorder %s158, %s160
      %p164 = scmp.eq.s32.totalorder %s19, 0
      %p165 = por %p163, %p164
      %p166 = scmp.ne.s32.totalorder %s158, %s160
      %p167 = scmp.eq.s32.totalorder %s24, 1
      %p168 = por %p166, %p167
      %p169 = scmp.ne.s32.totalorder %s160, %s161
      %p170 = scmp.eq.s32.totalorder %s24, 0
      %p171 = por %p169, %p170
      %p172 = scmp.ne.s32.totalorder %s160, %s161
      %p173 = scmp.eq.s32.totalorder %s25, 1
      %p174 = por %p172, %p173
      %p176 = scmp.ne.s32.totalorder %s161, %s175
      %p177 = scmp.eq.s32.totalorder %s25, 0
      %p178 = por %p176, %p177
      %s180 = sadd.s32 %s179, 1
      %p183 = scmp.eq.s32.totalorder %s19, 1
      %p184 = scmp.ne.s32.totalorder %s179, %s181
      %p185 = scmp.eq.s32.totalorder %s19, 0
      %p186 = por %p184, %p185
      %p187 = scmp.ne.s32.totalorder %s179, %s181
      %p188 = scmp.eq.s32.totalorder %s24, 1
      %p189 = por %p187, %p188
      %p190 = scmp.ne.s32.totalorder %s181, %s182
      %p191 = scmp.eq.s32.totalorder %s24, 0
      %p192 = por %p190, %p191
      %p193 = scmp.ne.s32.totalorder %s181, %s182
      %p194 = scmp.eq.s32.totalorder %s25, 1
      %p195 = por %p193, %p194
      %p197 = scmp.ne.s32.totalorder %s182, %s196
      %p198 = scmp.eq.s32.totalorder %s25, 0
      %p199 = por %p197, %p198
      %s201 = sadd.s32 %s200, 1
      %p204 = scmp.eq.s32.totalorder %s19, 1
      %p205 = scmp.ne.s32.totalorder %s200, %s202
      %p206 = scmp.eq.s32.totalorder %s19, 0
      %p207 = por %p205, %p206
      %p208 = scmp.ne.s32.totalorder %s200, %s202
      %p209 = scmp.eq.s32.totalorder %s24, 1
      %p210 = por %p208, %p209
      %p211 = scmp.ne.s32.totalorder %s202, %s203
      %p212 = scmp.eq.s32.totalorder %s24, 0
      %p213 = por %p211, %p212
      %p214 = scmp.ne.s32.totalorder %s202, %s203
      %p215 = scmp.eq.s32.totalorder %s25, 1
      %p216 = por %p214, %p215
      %p218 = scmp.ne.s32.totalorder %s203, %s217
      %p219 = scmp.eq.s32.totalorder %s25, 0
      %p220 = por %p218, %p219
      %s222 = sadd.s32 %s221, 1
      %p225 = scmp.eq.s32.totalorder %s19, 1
      %p226 = scmp.ne.s32.totalorder %s221, %s223
      %p227 = scmp.eq.s32.totalorder %s19, 0
      %p228 = por %p226, %p227
      %p229 = scmp.ne.s32.totalorder %s221, %s223
      %p230 = scmp.eq.s32.totalorder %s24, 1
      %p231 = por %p229, %p230
      %p232 = scmp.ne.s32.totalorder %s223, %s224
      %p233 = scmp.eq.s32.totalorder %s24, 0
      %p234 = por %p232, %p233
      %p235 = scmp.ne.s32.totalorder %s223, %s224
      %p236 = scmp.eq.s32.totalorder %s25, 1
      %p237 = por %p235, %p236
      %p239 = scmp.ne.s32.totalorder %s224, %s238
      %p240 = scmp.eq.s32.totalorder %s25, 0
      %p241 = por %p239, %p240
      %s243 = sadd.s32 %s242, 1
      %p246 = scmp.eq.s32.totalorder %s19, 1
      %p247 = scmp.ne.s32.totalorder %s242, %s244
      %p248 = scmp.eq.s32.totalorder %s19, 0
      %p249 = por %p247, %p248
      %p250 = scmp.ne.s32.totalorder %s242, %s244
      %p251 = scmp.eq.s32.totalorder %s24, 1
      %p252 = por %p250, %p251
      %p253 = scmp.ne.s32.totalorder %s244, %s245
      %p254 = scmp.eq.s32.totalorder %s24, 0
      %p255 = por %p253, %p254
      %p256 = scmp.ne.s32.totalorder %s244, %s245
      %p257 = scmp.eq.s32.totalorder %s25, 1
      %p258 = por %p256, %p257
      %p260 = scmp.ne.s32.totalorder %s245, %s259
      %p261 = scmp.eq.s32.totalorder %s25, 0
      %p262 = por %p260, %p261
      %p263 = scmp.le.s32.totalorder 1, %s19
      %p264 = scmp.lt.s32.totalorder %s19, 3
      %p265 = pnand %p263, %p264
      %p266 = pneg %p265
      // Predicated region
      $region9: #{tpu_custom_call.1} parent=5 // pred_check
        _
      $region10: #{tpu_custom_call.1} parent=5 // pred_check_branch
        %268 = sbr.rel (%p265) target = $region12
      $region11: #{tpu_custom_call.1} parent=5 // pred_region
        %s269 = ssub.s32 %s19, 1
        // Predicated region
        $region13: #{tpu_custom_call.1} parent=11 // pred_check
          %p270 = pneg %p66
        $region14: #{tpu_custom_call.1} parent=11 // pred_check_branch
          %272 = sbr.rel (%p270) target = $region16
        $region15: #{tpu_custom_call.1} parent=11 // pred_region
          _
        $region16: #{tpu_custom_call.1} parent=11 // pred_fallthru
          _
        // Predicated region
        $region17: #{tpu_custom_call.1} parent=11 // pred_check
          %p273 = pneg %p87
        $region18: #{tpu_custom_call.1} parent=11 // pred_check_branch
          %275 = sbr.rel (%p273) target = $region20
        $region19: #{tpu_custom_call.1} parent=11 // pred_region
          _
        $region20: #{tpu_custom_call.1} parent=11 // pred_fallthru
          _
        // Predicated region
        $region21: #{tpu_custom_call.1} parent=11 // pred_check
          %p276 = pneg %p108
        $region22: #{tpu_custom_call.1} parent=11 // pred_check_branch
          %278 = sbr.rel (%p276) target = $region24
        $region23: #{tpu_custom_call.1} parent=11 // pred_region
          _
        $region24: #{tpu_custom_call.1} parent=11 // pred_fallthru
          _
        // Predicated region
        $region25: #{tpu_custom_call.1} parent=11 // pred_check
          %p279 = pneg %p129
        $region26: #{tpu_custom_call.1} parent=11 // pred_check_branch
          %281 = sbr.rel (%p279) target = $region28
        $region27: #{tpu_custom_call.1} parent=11 // pred_region
          _
        $region28: #{tpu_custom_call.1} parent=11 // pred_fallthru
          _
        // Predicated region
        $region29: #{tpu_custom_call.1} parent=11 // pred_check
          %p282 = pneg %p150
        $region30: #{tpu_custom_call.1} parent=11 // pred_check_branch
          %284 = sbr.rel (%p282) target = $region32
        $region31: #{tpu_custom_call.1} parent=11 // pred_region
          _
        $region32: #{tpu_custom_call.1} parent=11 // pred_fallthru
          _
        // Predicated region
        $region33: #{tpu_custom_call.1} parent=11 // pred_check
          %p285 = pneg %p171
        $region34: #{tpu_custom_call.1} parent=11 // pred_check_branch
          %287 = sbr.rel (%p285) target = $region36
        $region35: #{tpu_custom_call.1} parent=11 // pred_region
          _
        $region36: #{tpu_custom_call.1} parent=11 // pred_fallthru
          _
        // Predicated region
        $region37: #{tpu_custom_call.1} parent=11 // pred_check
          %p288 = pneg %p192
        $region38: #{tpu_custom_call.1} parent=11 // pred_check_branch
          %290 = sbr.rel (%p288) target = $region40
        $region39: #{tpu_custom_call.1} parent=11 // pred_region
          _
        $region40: #{tpu_custom_call.1} parent=11 // pred_fallthru
          _
        // Predicated region
        $region41: #{tpu_custom_call.1} parent=11 // pred_check
          %p291 = pneg %p213
        $region42: #{tpu_custom_call.1} parent=11 // pred_check_branch
          %293 = sbr.rel (%p291) target = $region44
        $region43: #{tpu_custom_call.1} parent=11 // pred_region
          _
        $region44: #{tpu_custom_call.1} parent=11 // pred_fallthru
          _
      $region12: #{tpu_custom_call.1} parent=5 // pred_fallthru
        _
      %p294 = scmp.lt.s32.totalorder %s19, 2
      // Predicated region
      $region45: #{tpu_custom_call.1} parent=5 // pred_check
        %p295 = pneg %p294
      $region46: #{tpu_custom_call.1} parent=5 // pred_check_branch
        %297 = sbr.rel (%p295) target = $region48
      $region47: #{tpu_custom_call.1} parent=5 // pred_region
        // Predicated region
        $region49: #{tpu_custom_call.1} parent=47 // pred_check
          %p298 = pneg %p39
        $region50: #{tpu_custom_call.1} parent=47 // pred_check_branch
          %300 = sbr.rel (%p298) target = $region52
        $region51: #{tpu_custom_call.1} parent=47 // pred_region
          %p301 = scmp.lt.s32.totalorder %s19, 1
          %s302 = scalar_select %p301, %s19, 1
          %s303 = smul.addr %s302, 32
          %s304 = smul.addr %s303, 8
          %s305 = scalar_lea.vmem %s0, %s304
        $region52: #{tpu_custom_call.1} parent=47 // pred_fallthru
          _
      $region48: #{tpu_custom_call.1} parent=5 // pred_fallthru
        _
      %p306 = scmp.le.s32.totalorder 1, %s19
      %p307 = scmp.lt.s32.totalorder %s19, 3
      %p308 = pnand %p306, %p307
      %p309 = pneg %p308
      // Predicated region
      $region53: #{tpu_custom_call.1} parent=5 // pred_check
        _
      $region54: #{tpu_custom_call.1} parent=5 // pred_check_branch
        %311 = sbr.rel (%p308) target = $region56
      $region55: #{tpu_custom_call.1} parent=5 // pred_region
        %s312 = ssub.s32 %s19, 1
        %p313 = scmp.lt.s32.totalorder %s24, 1
        %s314 = scalar_select %p313, %s24, 1
        %s315 = smul.addr %s314, 32
        %s316 = smul.addr %s315, 8
        %s317 = scalar_lea.vmem %s0, %s316
        %p318 = pneg %p45
        %p319 = pneg %p42
        %p320 = pneg %p66
        %p321 = pneg %p63
        %p322 = pneg %p87
        %p323 = pneg %p84
        %p324 = pneg %p108
        %p325 = pneg %p105
        %p326 = pneg %p129
        %p327 = pneg %p126
        %p328 = pneg %p150
        %p329 = pneg %p147
        %p330 = pneg %p171
        %p331 = pneg %p168
        %p332 = pneg %p192
        %p333 = pneg %p189
        %p334 = pneg %p213
        %p335 = pneg %p210
        %p336 = pneg %p234
        %p337 = pneg %p231
        %p338 = pneg %p255
        %p339 = pneg %p252
        %p340 = scmp.lt.s32.totalorder %s24, 1
        %s341 = scalar_select %p340, %s24, 1
        %s342 = smul.addr %s341, 32
        %s343 = smul.addr %s342, 8
        %s344 = scalar_lea.vmem %s0, %s343
        %v345 = vld [vmem:[%s344] sm:$0xff]
        %v346 = vld [vmem:[%s344 + $0x8] sm:$0xff]
        %v347 = vld [vmem:[%s344 + $0x10] sm:$0xff]
        %v348 = vld [vmem:[%s344 + $0x18] sm:$0xff]
        %v349 = vld [vmem:[%s344 + $0x20] sm:$0xff]
        %v350 = vld [vmem:[%s344 + $0x28] sm:$0xff]
        %v351 = vld [vmem:[%s344 + $0x30] sm:$0xff]
        %v352 = vld [vmem:[%s344 + $0x38] sm:$0xff]
        %v353 = vld [vmem:[%s344 + $0x40] sm:$0xff]
        %v354 = vld [vmem:[%s344 + $0x48] sm:$0xff]
        %v355 = vld [vmem:[%s344 + $0x50] sm:$0xff]
        %v356 = vld [vmem:[%s344 + $0x58] sm:$0xff]
        %v357 = vld [vmem:[%s344 + $0x60] sm:$0xff]
        %v358 = vld [vmem:[%s344 + $0x68] sm:$0xff]
        %v359 = vld [vmem:[%s344 + $0x70] sm:$0xff]
        %v360 = vld [vmem:[%s344 + $0x78] sm:$0xff]
        %v361 = vld [vmem:[%s344 + $0x80] sm:$0xff]
        %v362 = vld [vmem:[%s344 + $0x88] sm:$0xff]
        %v363 = vld [vmem:[%s344 + $0x90] sm:$0xff]
        %v364 = vld [vmem:[%s344 + $0x98] sm:$0xff]
        %v365 = vld [vmem:[%s344 + $0xa0] sm:$0xff]
        %v366 = vld [vmem:[%s344 + $0xa8] sm:$0xff]
        %v367 = vld [vmem:[%s344 + $0xb0] sm:$0xff]
        %v368 = vld [vmem:[%s344 + $0xb8] sm:$0xff]
        %v369 = vld [vmem:[%s344 + $0xc0] sm:$0xff]
        %v370 = vld [vmem:[%s344 + $0xc8] sm:$0xff]
        %v371 = vld [vmem:[%s344 + $0xd0] sm:$0xff]
        %v372 = vld [vmem:[%s344 + $0xd8] sm:$0xff]
        %v373 = vld [vmem:[%s344 + $0xe0] sm:$0xff]
        %v374 = vld [vmem:[%s344 + $0xe8] sm:$0xff]
        %v375 = vld [vmem:[%s344 + $0xf0] sm:$0xff]
        %v376 = vld [vmem:[%s344 + $0xf8] sm:$0xff]
        %vm377 = vcmask 293888
        %v378 = vsel %vm377, %v345, 0.0
        %v379 = vsel %vm377, %v346, 0.0
        %v380 = vsel %vm377, %v347, 0.0
        %v381 = vsel %vm377, %v348, 0.0
        %v382 = vsel %vm377, %v349, 0.0
        %v383 = vsel %vm377, %v350, 0.0
        %v384 = vsel %vm377, %v351, 0.0
        %v385 = vsel %vm377, %v352, 0.0
        %v386 = vsel %vm377, %v353, 0.0
        %v387 = vsel %vm377, %v354, 0.0
        %v388 = vsel %vm377, %v355, 0.0
        %v389 = vsel %vm377, %v356, 0.0
        %v390 = vsel %vm377, %v357, 0.0
        %v391 = vsel %vm377, %v358, 0.0
        %v392 = vsel %vm377, %v359, 0.0
        %v393 = vsel %vm377, %v360, 0.0
        %v394 = vsel %vm377, %v361, 0.0
        %v395 = vsel %vm377, %v362, 0.0
        %v396 = vsel %vm377, %v363, 0.0
        %v397 = vsel %vm377, %v364, 0.0
        %v398 = vsel %vm377, %v365, 0.0
        %v399 = vsel %vm377, %v366, 0.0
        %v400 = vsel %vm377, %v367, 0.0
        %v401 = vsel %vm377, %v368, 0.0
        %v402 = vsel %vm377, %v369, 0.0
        %v403 = vsel %vm377, %v370, 0.0
        %v404 = vsel %vm377, %v371, 0.0
        %v405 = vsel %vm377, %v372, 0.0
        %v406 = vsel %vm377, %v373, 0.0
        %v407 = vsel %vm377, %v374, 0.0
        %v408 = vsel %vm377, %v375, 0.0
        %v409 = vsel %vm377, %v376, 0.0
        %v410 = vld [vmem:[%s1] sm:$0xff]
        %v411 = vld [vmem:[%s1 + $0x8] sm:$0xff]
        %v412 = vld [vmem:[%s1 + $0x10] sm:$0xff]
        %v413 = vld [vmem:[%s1 + $0x18] sm:$0xff]
        %v414 = vld [vmem:[%s1 + $0x20] sm:$0xff]
        %v415 = vld [vmem:[%s1 + $0x28] sm:$0xff]
        %v416 = vld [vmem:[%s1 + $0x30] sm:$0xff]
        %v417 = vld [vmem:[%s1 + $0x38] sm:$0xff]
        %v418 = vld [vmem:[%s1 + $0x40] sm:$0xff]
        %v419 = vld [vmem:[%s1 + $0x48] sm:$0xff]
        %v420 = vld [vmem:[%s1 + $0x50] sm:$0xff]
        %v421 = vld [vmem:[%s1 + $0x58] sm:$0xff]
        %v422 = vld [vmem:[%s1 + $0x60] sm:$0xff]
        %v423 = vld [vmem:[%s1 + $0x68] sm:$0xff]
        %v424 = vld [vmem:[%s1 + $0x70] sm:$0xff]
        %v425 = vld [vmem:[%s1 + $0x78] sm:$0xff]
        %v426 = vld [vmem:[%s2] sm:$0x1]
        %v428 = vperm.slane %v426, 0
        %430 = vmatpush.msra.mxu0 %v425
        %431 = vmatpush.msra.mxu0 %v424
        %432 = vmatpush.msra.mxu0 %v423
        %433 = vmatpush.msra.mxu0 %v422
        %434 = vmatpush.msra.mxu0 %v421
        %435 = vmatpush.msra.mxu0 %v420
        %436 = vmatpush.msra.mxu0 %v419
        %437 = vmatpush.msra.mxu0 %v418
        %438 = vmatpush.msra.mxu0 %v417
        %439 = vmatpush.msra.mxu0 %v416
        %440 = vmatpush.msra.mxu0 %v415
        %441 = vmatpush.msra.mxu0 %v414
        %442 = vmatpush.msra.mxu0 %v413
        %443 = vmatpush.msra.mxu0 %v412
        %444 = vmatpush.msra.mxu0 %v411
        %445 = vmatpush.msra.mxu0 %v410
        %446 = vmatmul.f32.gmra.mxu0 %v378
        %v447 = vpop.f32.mrf.mxu0
        %v448 = vadd.f32 %v428, %v447
        %449 = vmatmul.f32.gmra.mxu0 %v379
        %v450 = vpop.f32.mrf.mxu0
        %v451 = vadd.f32 %v428, %v450
        %452 = vmatmul.f32.gmra.mxu0 %v380
        %v453 = vpop.f32.mrf.mxu0
        %v454 = vadd.f32 %v428, %v453
        %455 = vmatmul.f32.gmra.mxu0 %v381
        %v456 = vpop.f32.mrf.mxu0
        %v457 = vadd.f32 %v428, %v456
        %458 = vmatmul.f32.gmra.mxu0 %v382
        %v459 = vpop.f32.mrf.mxu0
        %v460 = vadd.f32 %v428, %v459
        %461 = vmatmul.f32.gmra.mxu0 %v383
        %v462 = vpop.f32.mrf.mxu0
        %v463 = vadd.f32 %v428, %v462
        %464 = vmatmul.f32.gmra.mxu0 %v384
        %v465 = vpop.f32.mrf.mxu0
        %v466 = vadd.f32 %v428, %v465
        %467 = vmatmul.f32.gmra.mxu0 %v385
        %v468 = vpop.f32.mrf.mxu0
        %v469 = vadd.f32 %v428, %v468
        %470 = vmatmul.f32.gmra.mxu0 %v386
        %v471 = vpop.f32.mrf.mxu0
        %v472 = vadd.f32 %v428, %v471
        %473 = vmatmul.f32.gmra.mxu0 %v387
        %v474 = vpop.f32.mrf.mxu0
        %v475 = vadd.f32 %v428, %v474
        %476 = vmatmul.f32.gmra.mxu0 %v388
        %v477 = vpop.f32.mrf.mxu0
        %v478 = vadd.f32 %v428, %v477
        %479 = vmatmul.f32.gmra.mxu0 %v389
        %v480 = vpop.f32.mrf.mxu0
        %v481 = vadd.f32 %v428, %v480
        %482 = vmatmul.f32.gmra.mxu0 %v390
        %v483 = vpop.f32.mrf.mxu0
        %v484 = vadd.f32 %v428, %v483
        %485 = vmatmul.f32.gmra.mxu0 %v391
        %v486 = vpop.f32.mrf.mxu0
        %v487 = vadd.f32 %v428, %v486
        %488 = vmatmul.f32.gmra.mxu0 %v392
        %v489 = vpop.f32.mrf.mxu0
        %v490 = vadd.f32 %v428, %v489
        %491 = vmatmul.f32.gmra.mxu0 %v393
        %v492 = vpop.f32.mrf.mxu0
        %v493 = vadd.f32 %v428, %v492
        %494 = vmatmul.f32.gmra.mxu0 %v394
        %v495 = vpop.f32.mrf.mxu0
        %v496 = vadd.f32 %v428, %v495
        %497 = vmatmul.f32.gmra.mxu0 %v395
        %v498 = vpop.f32.mrf.mxu0
        %v499 = vadd.f32 %v428, %v498
        %500 = vmatmul.f32.gmra.mxu0 %v396
        %v501 = vpop.f32.mrf.mxu0
        %v502 = vadd.f32 %v428, %v501
        %503 = vmatmul.f32.gmra.mxu0 %v397
        %v504 = vpop.f32.mrf.mxu0
        %v505 = vadd.f32 %v428, %v504
        %506 = vmatmul.f32.gmra.mxu0 %v398
        %v507 = vpop.f32.mrf.mxu0
        %v508 = vadd.f32 %v428, %v507
        %509 = vmatmul.f32.gmra.mxu0 %v399
        %v510 = vpop.f32.mrf.mxu0
        %v511 = vadd.f32 %v428, %v510
        %512 = vmatmul.f32.gmra.mxu0 %v400
        %v513 = vpop.f32.mrf.mxu0
        %v514 = vadd.f32 %v428, %v513
        %515 = vmatmul.f32.gmra.mxu0 %v401
        %v516 = vpop.f32.mrf.mxu0
        %v517 = vadd.f32 %v428, %v516
        %518 = vmatmul.f32.gmra.mxu0 %v402
        %v519 = vpop.f32.mrf.mxu0
        %v520 = vadd.f32 %v428, %v519
        %521 = vmatmul.f32.gmra.mxu0 %v403
        %v522 = vpop.f32.mrf.mxu0
        %v523 = vadd.f32 %v428, %v522
        %524 = vmatmul.f32.gmra.mxu0 %v404
        %v525 = vpop.f32.mrf.mxu0
        %v526 = vadd.f32 %v428, %v525
        %527 = vmatmul.f32.gmra.mxu0 %v405
        %v528 = vpop.f32.mrf.mxu0
        %v529 = vadd.f32 %v428, %v528
        %530 = vmatmul.f32.gmra.mxu0 %v406
        %v531 = vpop.f32.mrf.mxu0
        %v532 = vadd.f32 %v428, %v531
        %533 = vmatmul.f32.gmra.mxu0 %v407
        %v534 = vpop.f32.mrf.mxu0
        %v535 = vadd.f32 %v428, %v534
        %536 = vmatmul.f32.gmra.mxu0 %v408
        %v537 = vpop.f32.mrf.mxu0
        %v538 = vadd.f32 %v428, %v537
        %539 = vmatmul.f32.gmra.mxu0 %v409
        %v540 = vpop.f32.mrf.mxu0
        %v541 = vadd.f32 %v428, %v540
        %542 = vdwg.mxu0
        %v543 = vmax.f32 %v448, 0.0
        %v544 = vmax.f32 %v451, 0.0
        %v545 = vmax.f32 %v454, 0.0
        %v546 = vmax.f32 %v457, 0.0
        %v547 = vmax.f32 %v460, 0.0
        %v548 = vmax.f32 %v463, 0.0
        %v549 = vmax.f32 %v466, 0.0
        %v550 = vmax.f32 %v469, 0.0
        %v551 = vmax.f32 %v472, 0.0
        %v552 = vmax.f32 %v475, 0.0
        %v553 = vmax.f32 %v478, 0.0
        %v554 = vmax.f32 %v481, 0.0
        %v555 = vmax.f32 %v484, 0.0
        %v556 = vmax.f32 %v487, 0.0
        %v557 = vmax.f32 %v490, 0.0
        %v558 = vmax.f32 %v493, 0.0
        %v559 = vmax.f32 %v496, 0.0
        %v560 = vmax.f32 %v499, 0.0
        %v561 = vmax.f32 %v502, 0.0
        %v562 = vmax.f32 %v505, 0.0
        %v563 = vmax.f32 %v508, 0.0
        %v564 = vmax.f32 %v511, 0.0
        %v565 = vmax.f32 %v514, 0.0
        %v566 = vmax.f32 %v517, 0.0
        %v567 = vmax.f32 %v520, 0.0
        %v568 = vmax.f32 %v523, 0.0
        %v569 = vmax.f32 %v526, 0.0
        %v570 = vmax.f32 %v529, 0.0
        %v571 = vmax.f32 %v532, 0.0
        %v572 = vmax.f32 %v535, 0.0
        %v573 = vmax.f32 %v538, 0.0
        %v574 = vmax.f32 %v541, 0.0
        %v575 = vadd.f32 %v543, %v544
        %v576 = vadd.f32 %v575, %v545
        %v577 = vadd.f32 %v576, %v546
        %v578 = vadd.f32 %v577, %v547
        %v579 = vadd.f32 %v578, %v548
        %v580 = vadd.f32 %v579, %v549
        %v581 = vadd.f32 %v580, %v550
        %v582 = vadd.f32 %v581, %v551
        %v583 = vadd.f32 %v582, %v552
        %v584 = vadd.f32 %v583, %v553
        %v585 = vadd.f32 %v584, %v554
        %v586 = vadd.f32 %v585, %v555
        %v587 = vadd.f32 %v586, %v556
        %v588 = vadd.f32 %v587, %v557
        %v589 = vadd.f32 %v588, %v558
        %v590 = vadd.f32 %v589, %v559
        %v591 = vadd.f32 %v590, %v560
        %v592 = vadd.f32 %v591, %v561
        %v593 = vadd.f32 %v592, %v562
        %v594 = vadd.f32 %v593, %v563
        %v595 = vadd.f32 %v594, %v564
        %v596 = vadd.f32 %v595, %v565
        %v597 = vadd.f32 %v596, %v566
        %v598 = vadd.f32 %v597, %v567
        %v599 = vadd.f32 %v598, %v568
        %v600 = vadd.f32 %v599, %v569
        %v601 = vadd.f32 %v600, %v570
        %v602 = vadd.f32 %v601, %v571
        %v603 = vadd.f32 %v602, %v572
        %v604 = vadd.f32 %v603, %v573
        %v605 = vadd.f32 %v604, %v574
        %v606 = vrot.slane %v605, 4
        %v607 = vadd.f32 %v605, %v606
        %v608 = vrot.slane %v607, 2
        %v609 = vadd.f32 %v607, %v608
        %v610 = vrot.slane %v609, 1
        %v611 = vadd.f32 %v609, %v610
        %v612 = vrcp.pop 256.0
        %v613 = vmul.f32 256.0, %v612
        %v614 = vsub.f32 1.0, %v613
        %v615 = vmul.f32 %v612, %v614
        %v616 = vadd.f32 %v612, %v615
        %vm617 = vweird.f32 %v612
        %v618 = vsel %vm617, %v612, %v616
        %v619 = vmul.f32 %v611, %v618
        %s620 = scalar_lea.vmem [#allocation2], %s24
        %621 = vst [vmem:[%s620] sm:$0x1] %v619
        %p622 = scmp.eq.s32.totalorder %s24, 1
        // Predicated region
        $region57: #{tpu_custom_call.1} parent=55 // pred_check
          %p623 = pneg %p622
        $region58: #{tpu_custom_call.1} parent=55 // pred_check_branch
          %625 = sbr.rel (%p623) target = $region60
        $region59: #{tpu_custom_call.1} parent=55 // pred_region
          %v626 = vld [vmem:[#allocation2] sm:$0x3]
          %v627 = vld [vmem:[%s3] sm:$0xff]
          %v628 = vld [vmem:[%s3 + $0x8] sm:$0xff]
          %v629 = vld [vmem:[%s3 + $0x10] sm:$0xff]
          %v630 = vld [vmem:[%s3 + $0x18] sm:$0xff]
          %v631 = vld [vmem:[%s3 + $0x20] sm:$0xff]
          %v632 = vld [vmem:[%s3 + $0x28] sm:$0xff]
          %v633 = vld [vmem:[%s3 + $0x30] sm:$0xff]
          %v634 = vld [vmem:[%s3 + $0x38] sm:$0xff]
          %v635 = vld [vmem:[%s3 + $0x40] sm:$0xff]
          %v636 = vld [vmem:[%s3 + $0x48] sm:$0xff]
          %v637 = vld [vmem:[%s3 + $0x50] sm:$0xff]
          %v638 = vld [vmem:[%s3 + $0x58] sm:$0xff]
          %v639 = vld [vmem:[%s3 + $0x60] sm:$0xff]
          %v640 = vld [vmem:[%s3 + $0x68] sm:$0xff]
          %v641 = vld [vmem:[%s3 + $0x70] sm:$0xff]
          %v642 = vld [vmem:[%s3 + $0x78] sm:$0xff]
          %v643 = vld [vmem:[%s4] sm:$0x1]
          %v645 = vperm.slane %v643, 0
          %647 = vmatpush.msra.mxu0 %v642
          %648 = vmatpush.msra.mxu0 %v641
          %649 = vmatpush.msra.mxu0 %v640
          %650 = vmatpush.msra.mxu0 %v639
          %651 = vmatpush.msra.mxu0 %v638
          %652 = vmatpush.msra.mxu0 %v637
          %653 = vmatpush.msra.mxu0 %v636
          %654 = vmatpush.msra.mxu0 %v635
          %655 = vmatpush.msra.mxu0 %v634
          %656 = vmatpush.msra.mxu0 %v633
          %657 = vmatpush.msra.mxu0 %v632
          %658 = vmatpush.msra.mxu0 %v631
          %659 = vmatpush.msra.mxu0 %v630
          %660 = vmatpush.msra.mxu0 %v629
          %661 = vmatpush.msra.mxu0 %v628
          %662 = vmatpush.msra.mxu0 %v627
          %663 = vmatmul.f32.gmra.mxu0 %v626
          %v664 = vpop.f32.mrf.mxu0
          %v665 = vadd.f32 %v645, %v664
          %666 = vdwg.mxu0
          %667 = vst [vmem:[#allocation3] sm:$0x3] %v665
          %v668 = vld [vmem:[%s5] sm:$0xff]
          %v669 = vld [vmem:[%s5 + $0x8] sm:$0xff]
          %v670 = vld [vmem:[%s5 + $0x10] sm:$0xff]
          %v671 = vld [vmem:[%s5 + $0x18] sm:$0xff]
          %v672 = vld [vmem:[%s5 + $0x20] sm:$0xff]
          %v673 = vld [vmem:[%s5 + $0x28] sm:$0xff]
          %v674 = vld [vmem:[%s5 + $0x30] sm:$0xff]
          %v675 = vld [vmem:[%s5 + $0x38] sm:$0xff]
          %v676 = vld [vmem:[%s5 + $0x40] sm:$0xff]
          %v677 = vld [vmem:[%s5 + $0x48] sm:$0xff]
          %v678 = vld [vmem:[%s5 + $0x50] sm:$0xff]
          %v679 = vld [vmem:[%s5 + $0x58] sm:$0xff]
          %v680 = vld [vmem:[%s5 + $0x60] sm:$0xff]
          %v681 = vld [vmem:[%s5 + $0x68] sm:$0xff]
          %v682 = vld [vmem:[%s5 + $0x70] sm:$0xff]
          %v683 = vld [vmem:[%s5 + $0x78] sm:$0xff]
          %v684 = vld [vmem:[%s6] sm:$0x1]
          %v686 = vperm.slane %v684, 0
          %688 = vmatpush.msra.mxu0 %v683
          %689 = vmatpush.msra.mxu0 %v682
          %690 = vmatpush.msra.mxu0 %v681
          %691 = vmatpush.msra.mxu0 %v680
          %692 = vmatpush.msra.mxu0 %v679
          %693 = vmatpush.msra.mxu0 %v678
          %694 = vmatpush.msra.mxu0 %v677
          %695 = vmatpush.msra.mxu0 %v676
          %696 = vmatpush.msra.mxu0 %v675
          %697 = vmatpush.msra.mxu0 %v674
          %698 = vmatpush.msra.mxu0 %v673
          %699 = vmatpush.msra.mxu0 %v672
          %700 = vmatpush.msra.mxu0 %v671
          %701 = vmatpush.msra.mxu0 %v670
          %702 = vmatpush.msra.mxu0 %v669
          %703 = vmatpush.msra.mxu0 %v668
          %704 = vmatmul.f32.gmra.mxu0 %v626
          %v705 = vpop.f32.mrf.mxu0
          %v706 = vadd.f32 %v686, %v705
          %707 = vdwg.mxu0
          %v708 = vmax.f32 %v706, 0.0
          %v709 = vld [vmem:[%s7] sm:$0xff]
          %v710 = vld [vmem:[%s7 + $0x8] sm:$0xff]
          %v711 = vld [vmem:[%s7 + $0x10] sm:$0xff]
          %v712 = vld [vmem:[%s7 + $0x18] sm:$0xff]
          %v713 = vld [vmem:[%s7 + $0x20] sm:$0xff]
          %v714 = vld [vmem:[%s7 + $0x28] sm:$0xff]
          %v715 = vld [vmem:[%s7 + $0x30] sm:$0xff]
          %v716 = vld [vmem:[%s7 + $0x38] sm:$0xff]
          %v717 = vld [vmem:[%s7 + $0x40] sm:$0xff]
          %v718 = vld [vmem:[%s7 + $0x48] sm:$0xff]
          %v719 = vld [vmem:[%s7 + $0x50] sm:$0xff]
          %v720 = vld [vmem:[%s7 + $0x58] sm:$0xff]
          %v721 = vld [vmem:[%s7 + $0x60] sm:$0xff]
          %v722 = vld [vmem:[%s7 + $0x68] sm:$0xff]
          %v723 = vld [vmem:[%s7 + $0x70] sm:$0xff]
          %v724 = vld [vmem:[%s7 + $0x78] sm:$0xff]
          %v725 = vld [vmem:[%s8] sm:$0x1]
          %v727 = vperm.slane %v725, 0
          %729 = vmatpush.msra.mxu0 %v724
          %730 = vmatpush.msra.mxu0 %v723
          %731 = vmatpush.msra.mxu0 %v722
          %732 = vmatpush.msra.mxu0 %v721
          %733 = vmatpush.msra.mxu0 %v720
          %734 = vmatpush.msra.mxu0 %v719
          %735 = vmatpush.msra.mxu0 %v718
          %736 = vmatpush.msra.mxu0 %v717
          %737 = vmatpush.msra.mxu0 %v716
          %738 = vmatpush.msra.mxu0 %v715
          %739 = vmatpush.msra.mxu0 %v714
          %740 = vmatpush.msra.mxu0 %v713
          %741 = vmatpush.msra.mxu0 %v712
          %742 = vmatpush.msra.mxu0 %v711
          %743 = vmatpush.msra.mxu0 %v710
          %744 = vmatpush.msra.mxu0 %v709
          %745 = vmatmul.f32.gmra.mxu0 %v708
          %v746 = vpop.f32.mrf.mxu0
          %v747 = vadd.f32 %v727, %v746
          %748 = vdwg.mxu0
          %749 = vst [vmem:[#allocation5] sm:$0x3] %v747
        $region60: #{tpu_custom_call.1} parent=55 // pred_fallthru
          _
        // Predicated region
        $region61: #{tpu_custom_call.1} parent=55 // pred_check
          %p750 = pneg %p231
        $region62: #{tpu_custom_call.1} parent=55 // pred_check_branch
          %752 = sbr.rel (%p750) target = $region64
        $region63: #{tpu_custom_call.1} parent=55 // pred_region
          %754 = vsyncadd [#allocation4], 0
          %s756 = sshll.u32 [#allocation3], 4
          %s757 = int_to_ptr.vmem [resolvable:$true] %s756
          %s758 = sshll.u32 %s9, 4
          %s759 = int_to_ptr.hbm [resolvable:$true] %s758
          %761 = dma.vmem_to_hbm [thread:$0]  %s757, 32, %s759, [#allocation4]
        $region64: #{tpu_custom_call.1} parent=55 // pred_fallthru
          _
        // Predicated region
        $region65: #{tpu_custom_call.1} parent=55 // pred_check
          %p762 = pneg %p252
        $region66: #{tpu_custom_call.1} parent=55 // pred_check_branch
          %764 = sbr.rel (%p762) target = $region68
        $region67: #{tpu_custom_call.1} parent=55 // pred_region
          %766 = vsyncadd [#allocation6], 0
          %s768 = sshll.u32 [#allocation5], 4
          %s769 = int_to_ptr.vmem [resolvable:$true] %s768
          %s770 = sshll.u32 %s10, 4
          %s771 = int_to_ptr.hbm [resolvable:$true] %s770
          %773 = dma.vmem_to_hbm [thread:$0]  %s769, 32, %s771, [#allocation6]
        $region68: #{tpu_custom_call.1} parent=55 // pred_fallthru
          _
        // Predicated region
        $region69: #{tpu_custom_call.1} parent=55 // pred_check
          %p774 = pneg %p231
        $region70: #{tpu_custom_call.1} parent=55 // pred_check_branch
          %776 = sbr.rel (%p774) target = $region72
        $region71: #{tpu_custom_call.1} parent=55 // pred_region
          %778 = dma.done [#allocation4], 32
        $region72: #{tpu_custom_call.1} parent=55 // pred_fallthru
          _
        // Predicated region
        $region73: #{tpu_custom_call.1} parent=55 // pred_check
          %p779 = pneg %p252
        $region74: #{tpu_custom_call.1} parent=55 // pred_check_branch
          %781 = sbr.rel (%p779) target = $region76
        $region75: #{tpu_custom_call.1} parent=55 // pred_region
          %783 = dma.done [#allocation6], 32
        $region76: #{tpu_custom_call.1} parent=55 // pred_fallthru
          _
      $region56: #{tpu_custom_call.1} parent=5 // pred_fallthru
        _
      %p784 = scmp.le.s32.totalorder 2, %s19
      // Predicated region
      $region77: #{tpu_custom_call.1} parent=5 // pred_check
        %p785 = pneg %p784
      $region78: #{tpu_custom_call.1} parent=5 // pred_check_branch
        %787 = sbr.rel (%p785) target = $region80
      $region79: #{tpu_custom_call.1} parent=5 // pred_region
        %s788 = ssub.s32 %s19, 2
      $region80: #{tpu_custom_call.1} parent=5 // pred_fallthru
        _
    $region6: #{tpu_custom_call.1} parent=1 // loop_footer
      %s23 = sadd.s32 1, %s19
    $region7: #{tpu_custom_call.1} parent=1 // loop_footer_branch
      %18 = sbr.rel target = $region3
    $region8: #{tpu_custom_call.1} parent=1 // loop_exit
      _
    %789 = vsyncpa [#allocation4], 1
    %s790 = scalar_lea.sflag [#allocation4], 1
    %791 = vsyncpa %s790, 1
    %792 = vsyncpa [#allocation6], 1

</llo_original>
